<compile_context>
chip_gen: v5e
topology: v5e:2x2
jax: 0.10.0
libtpu: 0.0.40
codegen_flags: <defaults>
</compile_context>

<pallas_src>
import functools
import math

import jax
import jax.numpy as jnp
from jax.experimental import pallas as pl
from jax.experimental.pallas import tpu as pltpu


def _lif_kernel(inp_ref, mem_ref, spike_out_ref, mem_out_ref, *, threshold, decay):
    # Pure elementwise VPU work on one (TILE_R, LANE_W) slab.
    mem_new = mem_ref[...] * decay + inp_ref[...]
    fired = mem_new >= threshold
    one = jnp.ones((), dtype=mem_new.dtype)
    zero = jnp.zeros((), dtype=mem_new.dtype)
    spike_out_ref[...] = jnp.where(fired, one, zero)
    mem_out_ref[...] = jnp.where(fired, zero, mem_new)


def lif_neuron_forward(inp, mem, *, threshold=1.5, decay=0.9,
                       lane_width=512, target_rows=512):
    """Pallas LIF neuron forward.

    inp, mem: float32 arrays of identical shape (any shape, e.g. NCHW).
    Returns (spike, mem_out) with the same shape/dtype as the inputs.
    """
    assert inp.shape == mem.shape, "input and mem must have identical shapes"
    assert inp.dtype == mem.dtype, "input and mem must have identical dtypes"
    orig_shape = inp.shape
    dtype = inp.dtype
    total = math.prod(orig_shape)

    # ---- Choose a lane-dense 2D layout -------------------------------------
    # Last dim must be a multiple of 128 for unmasked full-lane stores.
    lw = lane_width if total >= lane_width else 128

    # Pad the flat length up to a multiple of the lane width.
    rows = pl.cdiv(total, lw)
    # Per-block row count: cap at target_rows (512 rows x 512 lanes f32 = 1 MiB
    # per array per buffer => 8 MiB total with double buffering: safe on
    # v5e/v6e/v7x default scoped VMEM). If the whole tensor is smaller than
    # one block, the block just covers the full (padded) extent.
    tile_r = min(target_rows, rows)
    padded_rows = pl.cdiv(rows, tile_r) * tile_r
    padded_total = padded_rows * lw

    def _prep(x):
        flat = x.reshape(-1)
        if padded_total != total:
            # Zero padding is semantically safe: 0*decay + 0 = 0 < threshold,
            # and padded elements are sliced off before reshaping back.
            flat = jnp.pad(flat, (0, padded_total - total))
        return flat.reshape(padded_rows, lw)

    inp2 = _prep(inp)
    mem2 = _prep(mem)

    kernel = functools.partial(_lif_kernel, threshold=threshold, decay=decay)

    block = pl.BlockSpec((tile_r, lw), lambda i: (i, 0))
    grid = (padded_rows // tile_r,)

    spike_pad, mem_out_pad = pl.pallas_call(
        kernel,
        out_shape=(
            jax.ShapeDtypeStruct((padded_rows, lw), dtype),
            jax.ShapeDtypeStruct((padded_rows, lw), dtype),
        ),
        grid=grid,
        in_specs=[block, block],
        out_specs=(block, block),
        # mem_out writes over the (padded) mem input buffer.
        input_output_aliases={1: 1},
        compiler_params=pltpu.CompilerParams(
            dimension_semantics=("parallel",),
        ),
    )(inp2, mem2)

    def _unprep(x):
        return x.reshape(-1)[:total].reshape(orig_shape)

    return _unprep(spike_pad), _unprep(mem_out_pad)


def _lif_ref(inp, mem, threshold=1.5, decay=0.9):
    mem_new = mem * decay + inp
    spike = (mem_new >= threshold).astype(mem_new.dtype)
    return spike, mem_new * (1.0 - spike)


if __name__ == "__main__":
    key = jax.random.PRNGKey(0)
    k_in, k_mem = jax.random.split(key)

    # Small NCHW example, consistent with typical SNN conv feature maps.
    x = jax.random.normal(k_in, (2, 4, 16, 16), dtype=jnp.float32) * 1.5
    mem = jax.random.normal(k_mem, (2, 4, 16, 16), dtype=jnp.float32)

    spike, mem_out = lif_neuron_forward(x, mem, threshold=1.5, decay=0.9)
    jax.block_until_ready((spike, mem_out))

    # Correctness check against a pure-JAX reference.
    spike_ref, mem_ref_out = _lif_ref(x, mem)
    assert spike.shape == x.shape and mem_out.shape == x.shape
    assert jnp.allclose(spike, spike_ref, atol=1e-6), "spike mismatch"
    assert jnp.allclose(mem_out, mem_ref_out, atol=1e-6), "mem mismatch"

    print("KERNEL_OK")
</pallas_src>

<mosaic_0001>
module attributes {stable_mosaic.version = 11 : i64} {
  func.func @_lif_kernel(%arg0: i32, %arg1: memref<4x512xf32, #tpu.memory_space<vmem>>, %arg2: memref<4x512xf32, #tpu.memory_space<vmem>>, %arg3: memref<4x512xf32, #tpu.memory_space<vmem>>, %arg4: memref<4x512xf32, #tpu.memory_space<vmem>>) attributes {dimension_semantics = [#tpu.dimension_semantics<parallel>], iteration_bounds = array<i64: 1>, scalar_prefetch = 0 : i64, scratch_operands = 0 : i64, tpu.core_type = #tpu.core_type<tc>, window_params = [{transform_indices = @transform_0, window_bounds = array<i64: 4, 512>}, {transform_indices = @transform_1, window_bounds = array<i64: 4, 512>}, {transform_indices = @transform_2, window_bounds = array<i64: 4, 512>}, {transform_indices = @transform_3, window_bounds = array<i64: 4, 512>}]} {
    %c0 = arith.constant 0 : index
    %c0_0 = arith.constant 0 : index
    %0 = vector.load %arg2[%c0, %c0_0] : memref<4x512xf32, #tpu.memory_space<vmem>>, vector<4x512xf32>
    %cst = arith.constant 0.899999976 : f32
    %1 = vector.broadcast %cst : f32 to vector<4x512xf32>
    %2 = arith.mulf %0, %1 : vector<4x512xf32>
    %c0_1 = arith.constant 0 : index
    %c0_2 = arith.constant 0 : index
    %3 = vector.load %arg1[%c0_1, %c0_2] : memref<4x512xf32, #tpu.memory_space<vmem>>, vector<4x512xf32>
    %4 = arith.addf %2, %3 : vector<4x512xf32>
    %cst_3 = arith.constant 1.500000e+00 : f32
    %5 = vector.broadcast %cst_3 : f32 to vector<4x512xf32>
    %6 = arith.cmpf oge, %4, %5 : vector<4x512xf32>
    %cst_4 = arith.constant 1.000000e+00 : f32
    %cst_5 = arith.constant 0.000000e+00 : f32
    %7 = vector.broadcast %cst_4 : f32 to vector<4x512xf32>
    %8 = vector.broadcast %cst_5 : f32 to vector<4x512xf32>
    %9 = arith.select %6, %7, %8 : vector<4x512xi1>, vector<4x512xf32>
    %c0_6 = arith.constant 0 : index
    %c0_7 = arith.constant 0 : index
    %10 = vector.load %arg3[%c0_6, %c0_7] : memref<4x512xf32, #tpu.memory_space<vmem>>, vector<4x512xf32>
    tpu.vector_store %arg3[%c0_6, %c0_7], %9 {strides = array<i32>} : memref<4x512xf32, #tpu.memory_space<vmem>>, vector<4x512xf32>,
    %cst_8 = arith.constant 0.000000e+00 : f32
    %11 = vector.broadcast %cst_8 : f32 to vector<4x512xf32>
    %12 = arith.select %6, %11, %4 : vector<4x512xi1>, vector<4x512xf32>
    %c0_9 = arith.constant 0 : index
    %c0_10 = arith.constant 0 : index
    %13 = vector.load %arg4[%c0_9, %c0_10] : memref<4x512xf32, #tpu.memory_space<vmem>>, vector<4x512xf32>
    tpu.vector_store %arg4[%c0_9, %c0_10], %12 {strides = array<i32>} : memref<4x512xf32, #tpu.memory_space<vmem>>, vector<4x512xf32>,
    return
  }
  func.func @transform_0(%arg0: i32) -> (i32, i32) {
    %c0_i32 = arith.constant 0 : i32
    %c0_i32_0 = arith.constant 0 : i32
    return %arg0, %c0_i32 : i32, i32
  }
  func.func @transform_1(%arg0: i32) -> (i32, i32) {
    %c0_i32 = arith.constant 0 : i32
    %c0_i32_0 = arith.constant 0 : i32
    return %arg0, %c0_i32 : i32, i32
  }
  func.func @transform_2(%arg0: i32) -> (i32, i32) {
    %c0_i32 = arith.constant 0 : i32
    %c0_i32_0 = arith.constant 0 : i32
    return %arg0, %c0_i32 : i32, i32
  }
  func.func @transform_3(%arg0: i32) -> (i32, i32) {
    %c0_i32 = arith.constant 0 : i32
    %c0_i32_0 = arith.constant 0 : i32
    return %arg0, %c0_i32 : i32, i32
  }
}

</mosaic_0001>

<llo_original>
// kernel: tpu_custom_call.1
$region0: #{tpu_custom_call.1}
  #allocation0 [shape = 'u32[]', space=smem, size = 0x4, offset = 0x4, fixed_abs, tag = 'smem constant byte address 0x4 - core index']
  #allocation1 [shape = 'u32[72,128]{1,0:T(1,128)}', space=vmem, size = 0x9000, scoped, tag = 'internal scratch']
  %s0 = inlined_call_operand.vmem [shape: f32[4,512], index: 0, kind: input, shape index: {}]
  %s1 = inlined_call_operand.hbm [shape: f32[4,512], index: 1, kind: input, shape index: {}, may-alias: {1,3}]
  %s2 = inlined_call_operand.hbm [shape: f32[4,512], index: 2, kind: output, shape index: {0}]
  %s3 = inlined_call_operand.hbm [shape: f32[4,512], index: 3, kind: output, shape index: {1}, may-alias: {1,3}]
  %4 = xla_tuple %s2, %s3
  %s5 = sld [smem:[#allocation0]]
  $region30: #{tpu_custom_call.1} parent=0
    _
  %s7 = ssub.s32 1, %s5
  %s8 = scalar_select 0, %s7, %s5
  $region1: #{tpu_custom_call.1} parent=0
    #allocation2 [shape = 'u8[8192]{0}', space=vmem, size = 0x2000, scoped, tag = 'input window, operand 1, single buffered']
    #allocation3 [shape = 's32[1]{0}', space=sflag, size = 0x4, scoped, tag = 'scoped memory for tpu_custom_call.1']
    #allocation4 [shape = 's32[1]{0}', space=sflag, size = 0x4, scoped, tag = 'scoped memory for tpu_custom_call.1']
    #allocation5 [shape = 'u8[8192]{0}', space=vmem, size = 0x2000, scoped, tag = 'output window, operand 0, single buffered']
    #allocation6 [shape = 'u8[8192]{0}', space=vmem, size = 0x2000, scoped, tag = 'output window, operand 1, single buffered']
    #allocation7 [shape = 's32[1]{0}', space=sflag, size = 0x4, scoped, tag = 'scoped memory for tpu_custom_call.1']
    %9 = vsyncpa [#allocation3], 0
    %10 = vsyncpa [#allocation4], 0
    %11 = vsyncpa [#allocation7], 0
    // Predicated region
    $region2: #{tpu_custom_call.1} parent=1 // pred_check
      _
    $region3: #{tpu_custom_call.1} parent=1 // pred_check_branch
      %13 = sbr.rel (0) target = $region5
    $region4: #{tpu_custom_call.1} parent=1 // pred_region
      _
    $region5: #{tpu_custom_call.1} parent=1 // pred_fallthru
      _
    // Predicated region
    $region6: #{tpu_custom_call.1} parent=1 // pred_check
      _
    $region7: #{tpu_custom_call.1} parent=1 // pred_check_branch
      %15 = sbr.rel (0) target = $region9
    $region8: #{tpu_custom_call.1} parent=1 // pred_region
      %17 = vsyncadd [#allocation3], 0
      %s19 = sshll.u32 %s1, 4
      %s20 = int_to_ptr.hbm [resolvable:$true] %s19
      %s21 = sshll.u32 [#allocation2], 4
      %s22 = int_to_ptr.vmem [resolvable:$true] %s21
      %24 = dma.hbm_to_vmem [thread:$0]  %s20, 256, %s22, [#allocation3]
    $region9: #{tpu_custom_call.1} parent=1 // pred_fallthru
      _
    // Predicated region
    $region10: #{tpu_custom_call.1} parent=1 // pred_check
      _
    $region11: #{tpu_custom_call.1} parent=1 // pred_check_branch
      %26 = sbr.rel (0) target = $region13
    $region12: #{tpu_custom_call.1} parent=1 // pred_region
      %28 = dma.done [#allocation3], 256
    $region13: #{tpu_custom_call.1} parent=1 // pred_fallthru
      _
    %v29 = vld [vmem:[#allocation2] sm:$0xff]
    %v30 = vld [vmem:[#allocation2 + $0x8] sm:$0xff]
    %v31 = vmul.f32 %v29, 0.9
    %v32 = vmul.f32 %v30, 0.9
    %v33 = vld [vmem:[%s0] sm:$0xff]
    %v34 = vld [vmem:[%s0 + $0x8] sm:$0xff]
    %v35 = vadd.f32 %v31, %v33
    %v36 = vadd.f32 %v32, %v34
    %vm37 = vcmp.ge.f32.partialorder %v35, 1.5
    %vm38 = vcmp.ge.f32.partialorder %v36, 1.5
    %v39 = vsel %vm37, 1.0, 0.0
    %v40 = vsel %vm38, 1.0, 0.0
    %41 = vst [vmem:[#allocation5] sm:$0xff] %v39
    %42 = vst [vmem:[#allocation5 + $0x8] sm:$0xff] %v40
    %v43 = vsel %vm37, 0.0, %v35
    %v44 = vsel %vm38, 0.0, %v36
    %45 = vst [vmem:[#allocation6] sm:$0xff] %v43
    %46 = vst [vmem:[#allocation6 + $0x8] sm:$0xff] %v44
    // Predicated region
    $region14: #{tpu_custom_call.1} parent=1 // pred_check
      _
    $region15: #{tpu_custom_call.1} parent=1 // pred_check_branch
      %48 = sbr.rel (0) target = $region17
    $region16: #{tpu_custom_call.1} parent=1 // pred_region
      %50 = vsyncadd [#allocation4], 0
      %s52 = sshll.u32 [#allocation5], 4
      %s53 = int_to_ptr.vmem [resolvable:$true] %s52
      %s54 = sshll.u32 %s2, 4
      %s55 = int_to_ptr.hbm [resolvable:$true] %s54
      %57 = dma.vmem_to_hbm [thread:$0]  %s53, 256, %s55, [#allocation4]
    $region17: #{tpu_custom_call.1} parent=1 // pred_fallthru
      _
    // Predicated region
    $region18: #{tpu_custom_call.1} parent=1 // pred_check
      _
    $region19: #{tpu_custom_call.1} parent=1 // pred_check_branch
      %59 = sbr.rel (0) target = $region21
    $region20: #{tpu_custom_call.1} parent=1 // pred_region
      %61 = vsyncadd [#allocation7], 0
      %s63 = sshll.u32 [#allocation6], 4
      %s64 = int_to_ptr.vmem [resolvable:$true] %s63
      %s65 = sshll.u32 %s3, 4
      %s66 = int_to_ptr.hbm [resolvable:$true] %s65
      %68 = dma.vmem_to_hbm [thread:$0]  %s64, 256, %s66, [#allocation7]
    $region21: #{tpu_custom_call.1} parent=1 // pred_fallthru
      _
    // Predicated region
    $region22: #{tpu_custom_call.1} parent=1 // pred_check
      _
    $region23: #{tpu_custom_call.1} parent=1 // pred_check_branch
      %70 = sbr.rel (0) target = $region25
    $region24: #{tpu_custom_call.1} parent=1 // pred_region
      %72 = dma.done [#allocation4], 256
    $region25: #{tpu_custom_call.1} parent=1 // pred_fallthru
      _
    // Predicated region
    $region26: #{tpu_custom_call.1} parent=1 // pred_check
      _
    $region27: #{tpu_custom_call.1} parent=1 // pred_check_branch
      %74 = sbr.rel (0) target = $region29
    $region28: #{tpu_custom_call.1} parent=1 // pred_region
      %76 = dma.done [#allocation7], 256
    $region29: #{tpu_custom_call.1} parent=1 // pred_fallthru
      _
    %77 = vsyncpa [#allocation3], 1
    %78 = vsyncpa [#allocation4], 1
    %79 = vsyncpa [#allocation7], 1

</llo_original>
